<compile_context>
chip_gen: v7x
topology: tpu7x:2x2x1
jax: 0.10.0
libtpu: 0.0.40
codegen_flags: <defaults>
</compile_context>

<pallas_src>
import functools

import jax
import jax.numpy as jnp
from jax.experimental import pallas as pl
from jax.experimental.pallas import tpu as pltpu

LANES = 128
SUBLANES = 8
DEFAULT_TILE_ROWS = 4096            # 4096 x 128 f32 = 2 MiB per input block
VMEM_LIMIT_BYTES = 32 * 1024 * 1024  # safe on v5e/v6e (128 MiB) and v7x (64 MiB)


def _round_up(a, b):
    return (a + b - 1) // b * b


def _num_tensorcores():
    """Best-effort TensorCores per chip (megacore split factor)."""
    try:
        info = pltpu.get_tpu_info()
        for attr in ("num_cores", "num_tensorcores", "tensorcore_count",
                     "cores_per_chip"):
            n = getattr(info, attr, None)
            if isinstance(n, int) and n > 0:
                return n
    except Exception:
        pass
    try:
        kind = jax.devices()[0].device_kind.lower()
    except Exception:
        return 1
    # v4 / v5p / v7x have 2 TensorCores per chip; v5e / v6e have 1.
    if ("v4" in kind) or ("v5p" in kind) or ("7" in kind):
        return 2
    return 1


def _fold(sq, tile_rows):
    # (tile_rows, 128) -> (8, 128) partial sums: pure VPU adds over the
    # leading axis, no per-step XLU cross-lane reduce.
    return jnp.sum(sq.reshape(tile_rows // SUBLANES, SUBLANES, LANES), axis=0)


def _rmse_partial_kernel(x_ref, y_ref, o_ref, *, rows, tile_rows,
                         num_blocks, blocks_per_split, can_be_edge):
    s = pl.program_id(0)   # split index ("parallel", one per TensorCore)
    k = pl.program_id(1)   # reduction step within split ("arbitrary")

    # Output block (8,128) stays resident across the k loop of this split.
    @pl.when(k == 0)
    def _():
        o_ref[...] = jnp.zeros_like(o_ref)

    d = x_ref[...].astype(jnp.float32) - y_ref[...].astype(jnp.float32)
    sq = d * d

    if not can_be_edge:
        # Trace-time: no block can be partial or clamp-duplicated.
        o_ref[...] += _fold(sq, tile_rows)
    else:
        b = s * blocks_per_split + k   # logical block index

        @pl.when(b < num_blocks - 1)
        def _():
            # Interior blocks: unmasked fast path.
            o_ref[...] += _fold(sq, tile_rows)

        @pl.when(b >= num_blocks - 1)
        def _():
            # Edge path: true last block (possibly partial) and any
            # clamp-duplicated tail block.  Mask zeroes rows past the logical
            # extent (also squashes NaN/Inf read from garbage memory).
            row_ids = b * tile_rows + jax.lax.broadcasted_iota(
                jnp.int32, (tile_rows, LANES), 0)
            o_ref[...] += _fold(jnp.where(row_ids < rows, sq, 0.0), tile_rows)


def rmse_loss(x, y, *, eps=1e-6, tile_rows=DEFAULT_TILE_ROWS, num_splits=None):
    """sqrt(MSE(x, y) + eps), matching torch sqrt(nn.MSELoss()(x, y) + eps)."""
    assert x.shape == y.shape, "x and y must have the same shape"
    n = x.size

    xf = x.reshape(-1)
    yf = y.reshape(-1)

    if n % LANES != 0:
        # TODO(synk): rare fallback; jnp.pad costs one extra copy of the
        # inputs.  Zero-padding both keeps diff == 0, mean divides by true n.
        pad = _round_up(n, LANES) - n
        xf = jnp.pad(xf, (0, pad))
        yf = jnp.pad(yf, (0, pad))

    rows = xf.size // LANES
    x2 = xf.reshape(rows, LANES)
    y2 = yf.reshape(rows, LANES)

    # Sub-32-bit dtypes pack along sublanes: round the tile to the packed
    # multiple (8 for f32, 16 for bf16, 32 for int8/fp8).
    itemsize = max(1, jnp.dtype(x2.dtype).itemsize)
    sub_mult = SUBLANES * max(1, 4 // itemsize)

    tile_rows = max(sub_mult, min(tile_rows, _round_up(rows, sub_mult)))
    tile_rows = _round_up(tile_rows, sub_mult)

    if num_splits is None:
        num_splits = _num_tensorcores()

    num_blocks = pl.cdiv(rows, tile_rows)
    num_splits = max(1, min(int(num_splits), num_blocks))
    blocks_per_split = pl.cdiv(num_blocks, num_splits)

    # Can any grid step see a partial or clamp-duplicated block?
    can_be_edge = (rows % tile_rows != 0) or (
        blocks_per_split * num_splits != num_blocks)

    def in_map(s, k):
        b = s * blocks_per_split + k
        # Clamp so the DMA never targets a fully out-of-bounds block; the
        # in-kernel edge path zeroes any duplicated read.
        return (jnp.minimum(b, num_blocks - 1), 0)

    kernel = functools.partial(
        _rmse_partial_kernel,
        rows=rows, tile_rows=tile_rows, num_blocks=num_blocks,
        blocks_per_split=blocks_per_split, can_be_edge=can_be_edge)

    partials = pl.pallas_call(
        kernel,
        out_shape=jax.ShapeDtypeStruct((num_splits * SUBLANES, LANES),
                                       jnp.float32),
        grid_spec=pltpu.PrefetchScalarGridSpec(
            num_scalar_prefetch=0,
            grid=(num_splits, blocks_per_split),
            in_specs=[
                pl.BlockSpec((tile_rows, LANES), in_map),
                pl.BlockSpec((tile_rows, LANES), in_map),
            ],
            out_specs=pl.BlockSpec((SUBLANES, LANES), lambda s, k: (s, 0)),
        ),
        compiler_params=pltpu.CompilerParams(
            dimension_semantics=("parallel", "arbitrary"),
            vmem_limit_bytes=VMEM_LIMIT_BYTES,
        ),
    )(x2, y2)

    # Tiny epilogue: single cross-lane reduce + divide + sqrt in plain JAX.
    total = jnp.sum(partials)
    return jnp.sqrt(total / jnp.float32(n) + jnp.float32(eps))


if __name__ == "__main__":
    key = jax.random.PRNGKey(0)
    kx, ky = jax.random.split(key)

    # small NCHW-like shapes consistent with a typical regression target
    x = jax.random.normal(kx, (2, 4, 16, 16), dtype=jnp.float32)
    y = jax.random.normal(ky, (2, 4, 16, 16), dtype=jnp.float32)

    loss = rmse_loss(x, y)
    jax.block_until_ready(loss)

    # reference check against plain JAX (same math as torch.nn.MSELoss + sqrt)
    ref = jnp.sqrt(jnp.mean((x - y) ** 2) + 1e-6)
    assert jnp.allclose(loss, ref, rtol=1e-5, atol=1e-6), (loss, ref)

    print("KERNEL_OK")
</pallas_src>

<mosaic_0001>
module attributes {stable_mosaic.version = 11 : i64} {
  func.func @_rmse_partial_kernel(%arg0: i32, %arg1: i32, %arg2: memref<16x128xf32, #tpu.memory_space<vmem>>, %arg3: memref<16x128xf32, #tpu.memory_space<vmem>>, %arg4: memref<8x128xf32, #tpu.memory_space<vmem>>) attributes {dimension_semantics = [#tpu.dimension_semantics<parallel>, #tpu.dimension_semantics<arbitrary>], iteration_bounds = array<i64: 1, 1>, scalar_prefetch = 0 : i64, scratch_operands = 0 : i64, tpu.core_type = #tpu.core_type<tc>, window_params = [{transform_indices = @transform_0, window_bounds = array<i64: 16, 128>}, {transform_indices = @transform_1, window_bounds = array<i64: 16, 128>}, {transform_indices = @transform_2, window_bounds = array<i64: 8, 128>}]} {
    %c0_i32 = arith.constant 0 : i32
    %0 = arith.cmpi eq, %arg1, %c0_i32 : i32
    %1 = arith.extui %0 : i1 to i32
    %c0_i32_0 = arith.constant 0 : i32
    %2 = arith.cmpi ne, %1, %c0_i32_0 : i32
    scf.if %2 {
      %cst_8 = arith.constant 0.000000e+00 : f32
      %12 = vector.broadcast %cst_8 : f32 to vector<8x128xf32>
      %c0_9 = arith.constant 0 : index
      %c0_10 = arith.constant 0 : index
      %13 = vector.load %arg4[%c0_9, %c0_10] : memref<8x128xf32, #tpu.memory_space<vmem>>, vector<8x128xf32>
      tpu.vector_store %arg4[%c0_9, %c0_10], %12 {strides = array<i32>} : memref<8x128xf32, #tpu.memory_space<vmem>>, vector<8x128xf32>,
    } else {
    }
    %c0 = arith.constant 0 : index
    %c0_1 = arith.constant 0 : index
    %3 = vector.load %arg2[%c0, %c0_1] : memref<16x128xf32, #tpu.memory_space<vmem>>, vector<16x128xf32>
    %c0_2 = arith.constant 0 : index
    %c0_3 = arith.constant 0 : index
    %4 = vector.load %arg3[%c0_2, %c0_3] : memref<16x128xf32, #tpu.memory_space<vmem>>, vector<16x128xf32>
    %5 = arith.subf %3, %4 : vector<16x128xf32>
    %6 = arith.mulf %5, %5 : vector<16x128xf32>
    %c0_4 = arith.constant 0 : index
    %c0_5 = arith.constant 0 : index
    %7 = vector.load %arg4[%c0_4, %c0_5] : memref<8x128xf32, #tpu.memory_space<vmem>>, vector<8x128xf32>
    %8 = vector.shape_cast %6 : vector<16x128xf32> to vector<2x8x128xf32>
    %cst = arith.constant dense<0.000000e+00> : vector<8x128xf32>
    %9 = vector.multi_reduction <add>, %8, %cst [0] : vector<2x8x128xf32> to vector<8x128xf32>
    %10 = arith.addf %7, %9 : vector<8x128xf32>
    %c0_6 = arith.constant 0 : index
    %c0_7 = arith.constant 0 : index
    %11 = vector.load %arg4[%c0_6, %c0_7] : memref<8x128xf32, #tpu.memory_space<vmem>>, vector<8x128xf32>
    tpu.vector_store %arg4[%c0_6, %c0_7], %10 {strides = array<i32>} : memref<8x128xf32, #tpu.memory_space<vmem>>, vector<8x128xf32>,
    return
  }
  func.func @transform_0(%arg0: i32, %arg1: i32) -> (i32, i32) {
    %c1_i32 = arith.constant 1 : i32
    %0 = arith.muli %arg0, %c1_i32 : i32
    %1 = arith.addi %0, %arg1 : i32
    %c0_i32 = arith.constant 0 : i32
    %2 = arith.minsi %1, %c0_i32 : i32
    %c0_i32_0 = arith.constant 0 : i32
    %c0_i32_1 = arith.constant 0 : i32
    return %2, %c0_i32_0 : i32, i32
  }
  func.func @transform_1(%arg0: i32, %arg1: i32) -> (i32, i32) {
    %c1_i32 = arith.constant 1 : i32
    %0 = arith.muli %arg0, %c1_i32 : i32
    %1 = arith.addi %0, %arg1 : i32
    %c0_i32 = arith.constant 0 : i32
    %2 = arith.minsi %1, %c0_i32 : i32
    %c0_i32_0 = arith.constant 0 : i32
    %c0_i32_1 = arith.constant 0 : i32
    return %2, %c0_i32_0 : i32, i32
  }
  func.func @transform_2(%arg0: i32, %arg1: i32) -> (i32, i32) {
    %c0_i32 = arith.constant 0 : i32
    %c0_i32_0 = arith.constant 0 : i32
    return %arg0, %c0_i32 : i32, i32
  }
}

</mosaic_0001>

<llo_original>
// kernel: tpu_custom_call.1
$region0: #{tpu_custom_call.1}
  #allocation0 [shape = 'u32[]', space=smem, size = 0x4, offset = 0x4, fixed_abs, tag = 'smem constant byte address 0x4 - core index']
  #allocation1 [shape = 'u32[144,128]{1,0:T(1,128)}', space=vmem, size = 0x12000, scoped, tag = 'internal scratch']
  %s0 = inlined_call_operand.hbm [shape: f32[16,128], index: 0, kind: input, shape index: {}]
  %s1 = inlined_call_operand.hbm [shape: f32[16,128], index: 1, kind: input, shape index: {}]
  %s2 = inlined_call_operand.hbm [shape: f32[8,128], index: 2, kind: output, shape index: {}]
  %s3 = sld [smem:[#allocation0]]
  $region30: #{tpu_custom_call.1} parent=0
    _
  %s5 = ssub.s32 1, %s3
  %s6 = scalar_select 0, %s5, %s3
  $region1: #{tpu_custom_call.1} parent=0
    #allocation2 [shape = 'u8[8192]{0}', space=vmem, size = 0x2000, scoped, tag = 'input window, operand 0, single buffered']
    #allocation3 [shape = 's32[1]{0}', space=sflag, size = 0x4, scoped, tag = 'scoped memory for tpu_custom_call.1']
    #allocation4 [shape = 's32[1]{0}', space=sflag, size = 0x4, scoped, tag = 'scoped memory for tpu_custom_call.1']
    #allocation5 [shape = 'u8[8192]{0}', space=vmem, size = 0x2000, scoped, tag = 'input window, operand 1, single buffered']
    #allocation6 [shape = 's32[1]{0}', space=sflag, size = 0x4, scoped, tag = 'scoped memory for tpu_custom_call.1']
    #allocation7 [shape = 'u8[4096]{0}', space=vmem, size = 0x1000, scoped, tag = 'output window, operand 0, single buffered']
    %7 = vsyncpa [#allocation3], 0
    %8 = vsyncpa [#allocation6], 0
    %9 = vsyncpa [#allocation4], 0
    // Predicated region
    $region2: #{tpu_custom_call.1} parent=1 // pred_check
      _
    $region3: #{tpu_custom_call.1} parent=1 // pred_check_branch
      %11 = sbr.rel (0) target = $region5
    $region4: #{tpu_custom_call.1} parent=1 // pred_region
      %s12 = sadd.s32 0, 0
      %p13 = scmp.lt.s32.totalorder %s12, 0
      %s14 = scalar_select %p13, %s12, 0
      %s15 = smul.u32 2, %s14
      %s17 = ssub.s32 256, 256
      %18 = vsyncadd [#allocation3], %s17
      %s19 = smul.addr %s15, 128
      %s20 = scalar_lea.hbm %s0, %s19
      %s21 = sshll.u32 [#allocation2], 4
      %s22 = int_to_ptr.vmem [resolvable:$true] %s21
      %27 = dma.hbm_to_vmem [thread:$0]  %s20, 256, %s22, [#allocation3], 128, 128, 8
    $region5: #{tpu_custom_call.1} parent=1 // pred_fallthru
      _
    // Predicated region
    $region6: #{tpu_custom_call.1} parent=1 // pred_check
      _
    $region7: #{tpu_custom_call.1} parent=1 // pred_check_branch
      %29 = sbr.rel (0) target = $region9
    $region8: #{tpu_custom_call.1} parent=1 // pred_region
      %s30 = sadd.s32 0, 0
      %p31 = scmp.lt.s32.totalorder %s30, 0
      %s32 = scalar_select %p31, %s30, 0
      %s33 = smul.u32 2, %s32
      %s35 = ssub.s32 256, 256
      %36 = vsyncadd [#allocation6], %s35
      %s37 = smul.addr %s33, 128
      %s38 = scalar_lea.hbm %s1, %s37
      %s39 = sshll.u32 [#allocation5], 4
      %s40 = int_to_ptr.vmem [resolvable:$true] %s39
      %45 = dma.hbm_to_vmem [thread:$0]  %s38, 256, %s40, [#allocation6], 128, 128, 8
    $region9: #{tpu_custom_call.1} parent=1 // pred_fallthru
      _
    // Predicated region
    $region10: #{tpu_custom_call.1} parent=1 // pred_check
      _
    $region11: #{tpu_custom_call.1} parent=1 // pred_check_branch
      %47 = sbr.rel (0) target = $region13
    $region12: #{tpu_custom_call.1} parent=1 // pred_region
      %48 = dma.done [#allocation3], 256
    $region13: #{tpu_custom_call.1} parent=1 // pred_fallthru
      _
    // Predicated region
    $region14: #{tpu_custom_call.1} parent=1 // pred_check
      _
    $region15: #{tpu_custom_call.1} parent=1 // pred_check_branch
      %50 = sbr.rel (0) target = $region17
    $region16: #{tpu_custom_call.1} parent=1 // pred_region
      %51 = dma.done [#allocation6], 256
    $region17: #{tpu_custom_call.1} parent=1 // pred_fallthru
      _
    %s52 = sadd.s32 0, 0
    %p53 = scmp.lt.s32.totalorder %s52, 0
    %s54 = scalar_select %p53, %s52, 0
    %s55 = smul.u32 2, %s54
    %s56 = sadd.s32 0, 0
    %p57 = scmp.lt.s32.totalorder %s56, 0
    %s58 = scalar_select %p57, %s56, 0
    %s59 = smul.u32 2, %s58
    %p60 = scmp.eq.s32.totalorder 0, 0
    // Predicated region
    $region18: #{tpu_custom_call.1} parent=1 // pred_check
      %p61 = pneg %p60
    $region19: #{tpu_custom_call.1} parent=1 // pred_check_branch
      %63 = sbr.rel (%p61) target = $region21
    $region20: #{tpu_custom_call.1} parent=1 // pred_region
      %64 = vst [vmem:[#allocation7] sm:$0xff] 0.0
    $region21: #{tpu_custom_call.1} parent=1 // pred_fallthru
      _
    %v65 = vld [vmem:[#allocation2] sm:$0xff]
    %v66 = vld [vmem:[#allocation2 + $0x8] sm:$0xff]
    %v67 = vld [vmem:[#allocation5] sm:$0xff]
    %v68 = vld [vmem:[#allocation5 + $0x8] sm:$0xff]
    %v69 = vsub.f32 %v65, %v67
    %v70 = vsub.f32 %v66, %v68
    %v71 = vmul.f32 %v69, %v69
    %v72 = vmul.f32 %v70, %v70
    %v73 = vld [vmem:[#allocation7] sm:$0xff]
    %v74 = vadd.f32 %v71, %v72
    %v75 = vadd.f32 %v73, %v74
    %76 = vst [vmem:[#allocation7] sm:$0xff] %v75
    // Predicated region
    $region22: #{tpu_custom_call.1} parent=1 // pred_check
      _
    $region23: #{tpu_custom_call.1} parent=1 // pred_check_branch
      %78 = sbr.rel (0) target = $region25
    $region24: #{tpu_custom_call.1} parent=1 // pred_region
      %s80 = ssub.s32 128, 128
      %81 = vsyncadd [#allocation4], %s80
      %s83 = sshll.u32 [#allocation7], 4
      %s84 = int_to_ptr.vmem [resolvable:$true] %s83
      %86 = dma.vmem_to_hbm [thread:$0]  %s84, 128, %s2, [#allocation4]
    $region25: #{tpu_custom_call.1} parent=1 // pred_fallthru
      _
    // Predicated region
    $region26: #{tpu_custom_call.1} parent=1 // pred_check
      _
    $region27: #{tpu_custom_call.1} parent=1 // pred_check_branch
      %88 = sbr.rel (0) target = $region29
    $region28: #{tpu_custom_call.1} parent=1 // pred_region
      %89 = dma.done [#allocation4], 128
    $region29: #{tpu_custom_call.1} parent=1 // pred_fallthru
      _
    %90 = vsyncpa [#allocation3], 1
    %91 = vsyncpa [#allocation6], 1
    %92 = vsyncpa [#allocation4], 1

</llo_original>
